<compile_context>
chip_gen: v7x
topology: tpu7x:2x2x1
jax: 0.10.0
libtpu: 0.0.40
codegen_flags: <defaults>
</compile_context>

<pallas_src>
import functools
import math

import jax
import jax.numpy as jnp
from jax.experimental import pallas as pl
from jax.experimental.pallas import tpu as pltpu


def _cos_m_theta_horner(c, m):
    """cos(m*theta) as a Chebyshev polynomial of c = cos(theta), Horner form."""
    c2 = c * c
    if m == 0:
        return jnp.ones_like(c)
    if m == 1:
        return c
    if m == 2:
        return 2.0 * c2 - 1.0
    if m == 3:
        return (4.0 * c2 - 3.0) * c
    if m == 4:
        return (8.0 * c2 - 8.0) * c2 + 1.0
    if m == 5:
        return ((16.0 * c2 - 20.0) * c2 + 5.0) * c
    raise ValueError("m must be in [0, 5]")


def _angle_linear_kernel(x_ref, w_ref, xmod_ref, invw_ref, cos_x_ref, phi_x_ref, *, m):
    x = x_ref[...]           # [TM, D]  float32
    w = w_ref[...]           # [D, TN]  float32 (already renormed * 1e5)
    x_mod = xmod_ref[...]    # [TM, 1]  precomputed ||x||_2 per row
    inv_w = invw_ref[...]    # [1, TN]  precomputed 1/||w||_2 per column

    # MXU matmul: x @ w, f32 accumulate.
    # TODO(synk): optionally cast x/w to bf16 for the matmul on v6e/v7x (needs looser tolerance).
    inner = jnp.dot(x, w, preferred_element_type=jnp.float32)    # [TM, TN]

    # Skinny reciprocal of x_mod (guarded for zero-padded rows), then one
    # multiply per full tile instead of two divides.
    inv_x = jnp.where(x_mod > 0.0, 1.0 / x_mod, 0.0)             # [TM, 1]
    cos_theta = jnp.clip(inner * inv_x * inv_w, -1.0, 1.0)

    cos_m_theta = _cos_m_theta_horner(cos_theta, m)

    # k = floor(m * arccos(cos_theta) / pi) without arccos:
    #   k >= j  <=>  theta >= j*pi/m  <=>  cos_theta <= cos(j*pi/m)
    k = jnp.zeros_like(cos_theta)
    for j in range(1, m + 1):
        thresh = math.cos(j * math.pi / m)
        k = k + (cos_theta <= thresh).astype(cos_theta.dtype)

    # (-1)**k for non-negative integer-valued float k.
    sign = 1.0 - 2.0 * jnp.mod(k, 2.0)
    phi_theta = sign * cos_m_theta - 2.0 * k

    cos_x_ref[...] = (cos_theta * x_mod).astype(cos_x_ref.dtype)
    phi_x_ref[...] = (phi_theta * x_mod).astype(phi_x_ref.dtype)


def _round_up(a, b):
    return ((a + b - 1) // b) * b


def angle_linear(x, weight, m=4, tm=256, tn=256):
    """AngleLinear forward.  x: [B, in_planes], weight: [in_planes, out_planes]."""
    B, D = x.shape
    C = weight.shape[1]

    # Parameter prep (glue): w = weight.renorm(2, 1, 1e-5).mul(1e5)
    # torch.renorm(2, dim=1, maxnorm): each column scaled down to norm <= maxnorm.
    col_norm = jnp.sqrt(jnp.sum(weight * weight, axis=0, keepdims=True))
    scale = jnp.where(col_norm > 1e-5, 1e-5 / col_norm, 1.0)
    w = weight * scale * 1e5

    # Precompute norms once (single source of truth; also required if D were tiled).
    x_mod = jnp.sqrt(jnp.sum(x * x, axis=1, keepdims=True))              # [B, 1]
    w_mod = jnp.sqrt(jnp.sum(w * w, axis=0, keepdims=True))              # [1, C]
    inv_w = jnp.where(w_mod > 0.0, 1.0 / w_mod, 0.0)                     # [1, C]

    # Tile sizes: TM multiple of 8, TN multiple of 128 (lane-dense output stores).
    TM = min(tm, _round_up(B, 8))
    TN = min(tn, _round_up(C, 128))

    # Pad batch / class axes so the grid covers them exactly.
    B_p = _round_up(B, TM)
    C_p = _round_up(C, TN)
    x_p = jnp.pad(x, ((0, B_p - B), (0, 0)))
    w_p = jnp.pad(w, ((0, 0), (0, C_p - C)))
    x_mod_p = jnp.pad(x_mod, ((0, B_p - B), (0, 0)))
    inv_w_p = jnp.pad(inv_w, ((0, 0), (0, C_p - C)))

    grid = (C_p // TN, B_p // TM)   # j (class tile) outer -> weight tile re-used across batch sweep

    kernel = functools.partial(_angle_linear_kernel, m=m)
    cos_x_p, phi_x_p = pl.pallas_call(
        kernel,
        grid=grid,
        out_shape=(
            jax.ShapeDtypeStruct((B_p, C_p), x.dtype),
            jax.ShapeDtypeStruct((B_p, C_p), x.dtype),
        ),
        in_specs=[
            pl.BlockSpec((TM, D), lambda j, i: (i, 0)),   # x tile
            pl.BlockSpec((D, TN), lambda j, i: (0, j)),   # w tile (slow-varying)
            pl.BlockSpec((TM, 1), lambda j, i: (i, 0)),   # ||x|| per row
            pl.BlockSpec((1, TN), lambda j, i: (0, j)),   # 1/||w|| per column
        ],
        out_specs=(
            pl.BlockSpec((TM, TN), lambda j, i: (i, j)),
            pl.BlockSpec((TM, TN), lambda j, i: (i, j)),
        ),
        compiler_params=pltpu.CompilerParams(
            dimension_semantics=("parallel", "parallel"),
        ),
    )(x_p, w_p, x_mod_p, inv_w_p)

    return cos_x_p[:B, :C], phi_x_p[:B, :C]


def _reference(x, weight, m=4):
    # Pure-JAX reference mirroring the PyTorch code (arccos/floor path).
    col_norm = jnp.sqrt(jnp.sum(weight * weight, axis=0, keepdims=True))
    scale = jnp.where(col_norm > 1e-5, 1e-5 / col_norm, 1.0)
    w = weight * scale * 1e5
    x_mod = jnp.sqrt(jnp.sum(x ** 2, axis=1))
    w_mod = jnp.sqrt(jnp.sum(w ** 2, axis=0))
    cos_theta = jnp.clip(x @ w / x_mod[:, None] / w_mod[None, :], -1.0, 1.0)
    cos_fns = [
        lambda c: c ** 0,
        lambda c: c,
        lambda c: 2 * c ** 2 - 1,
        lambda c: 4 * c ** 3 - 3 * c,
        lambda c: 8 * c ** 4 - 8 * c ** 2 + 1,
        lambda c: 16 * c ** 5 - 20 * c ** 3 + 5 * c,
    ]
    cos_m_theta = cos_fns[m](cos_theta)
    theta = jnp.arccos(cos_theta)
    k = jnp.floor(m * theta / math.pi)
    phi_theta = (1.0 - 2.0 * jnp.mod(k, 2.0)) * cos_m_theta - 2.0 * k
    return cos_theta * x_mod[:, None], phi_theta * x_mod[:, None]


if __name__ == "__main__":
    key = jax.random.PRNGKey(0)
    k_x, k_w = jax.random.split(key)

    batch, in_planes, out_planes, m = 8, 32, 16, 4

    x = jax.random.normal(k_x, (batch, in_planes), dtype=jnp.float32)
    # weight.data.uniform_(-1, 1)  (renorm/mul applied inside angle_linear, as in forward)
    weight = jax.random.uniform(
        k_w, (in_planes, out_planes), dtype=jnp.float32, minval=-1.0, maxval=1.0
    )

    cos_x, phi_x = angle_linear(x, weight, m=m)
    jax.block_until_ready((cos_x, phi_x))

    ref_cos, ref_phi = _reference(x, weight, m=m)
    assert cos_x.shape == (batch, out_planes) and phi_x.shape == (batch, out_planes)
    assert jnp.allclose(cos_x, ref_cos, atol=1e-4, rtol=1e-4)
    assert jnp.allclose(phi_x, ref_phi, atol=1e-4, rtol=1e-4)

    print("KERNEL_OK")
</pallas_src>

<mosaic_0001>
module attributes {stable_mosaic.version = 11 : i64} {
  func.func @_angle_linear_kernel(%arg0: i32, %arg1: i32, %arg2: memref<8x32xf32, #tpu.memory_space<vmem>>, %arg3: memref<32x128xf32, #tpu.memory_space<vmem>>, %arg4: memref<8x1xf32, #tpu.memory_space<vmem>>, %arg5: memref<1x128xf32, #tpu.memory_space<vmem>>, %arg6: memref<8x128xf32, #tpu.memory_space<vmem>>, %arg7: memref<8x128xf32, #tpu.memory_space<vmem>>) attributes {dimension_semantics = [#tpu.dimension_semantics<parallel>, #tpu.dimension_semantics<parallel>], iteration_bounds = array<i64: 1, 1>, scalar_prefetch = 0 : i64, scratch_operands = 0 : i64, tpu.core_type = #tpu.core_type<tc>, window_params = [{transform_indices = @transform_0, window_bounds = array<i64: 8, 32>}, {transform_indices = @transform_1, window_bounds = array<i64: 32, 128>}, {transform_indices = @transform_2, window_bounds = array<i64: 8, 1>}, {transform_indices = @transform_3, window_bounds = array<i64: 1, 128>}, {transform_indices = @transform_4, window_bounds = array<i64: 8, 128>}, {transform_indices = @transform_5, window_bounds = array<i64: 8, 128>}]} {
    %c0 = arith.constant 0 : index
    %c0_0 = arith.constant 0 : index
    %0 = vector.load %arg2[%c0, %c0_0] : memref<8x32xf32, #tpu.memory_space<vmem>>, vector<8x32xf32>
    %c0_1 = arith.constant 0 : index
    %c0_2 = arith.constant 0 : index
    %1 = vector.load %arg3[%c0_1, %c0_2] : memref<32x128xf32, #tpu.memory_space<vmem>>, vector<32x128xf32>
    %c0_3 = arith.constant 0 : index
    %c0_4 = arith.constant 0 : index
    %2 = vector.load %arg4[%c0_3, %c0_4] : memref<8x1xf32, #tpu.memory_space<vmem>>, vector<8x1xf32>
    %c0_5 = arith.constant 0 : index
    %c0_6 = arith.constant 0 : index
    %3 = vector.load %arg5[%c0_5, %c0_6] : memref<1x128xf32, #tpu.memory_space<vmem>>, vector<1x128xf32>
    %cst = arith.constant dense<0.000000e+00> : vector<8x128xf32>
    %4 = tpu.matmul %0, %1, %cst {dimension_numbers = #tpu.dot_dimension_numbers<[1], [0], [0], [1], [0, 0, 1, 1], [], []>} : vector<8x32xf32>, vector<32x128xf32>, vector<8x128xf32> -> vector<8x128xf32>
    %cst_7 = arith.constant 0.000000e+00 : f32
    %5 = vector.broadcast %cst_7 : f32 to vector<8x1xf32>
    %6 = arith.cmpf ogt, %2, %5 : vector<8x1xf32>
    %cst_8 = arith.constant 1.000000e+00 : f32
    %7 = vector.broadcast %cst_8 : f32 to vector<8x1xf32>
    %8 = arith.divf %7, %2 : vector<8x1xf32>
    %cst_9 = arith.constant 0.000000e+00 : f32
    %9 = vector.broadcast %cst_9 : f32 to vector<8x1xf32>
    %10 = arith.select %6, %8, %9 : vector<8x1xi1>, vector<8x1xf32>
    %11 = vector.broadcast %10 : vector<8x1xf32> to vector<8x128xf32>
    %12 = arith.mulf %4, %11 : vector<8x128xf32>
    %13 = vector.broadcast %3 : vector<1x128xf32> to vector<8x128xf32>
    %14 = arith.mulf %12, %13 : vector<8x128xf32>
    %cst_10 = arith.constant -1.000000e+00 : f32
    %cst_11 = arith.constant 1.000000e+00 : f32
    %15 = vector.broadcast %cst_10 : f32 to vector<8x128xf32>
    %16 = arith.maximumf %15, %14 : vector<8x128xf32>
    %17 = vector.broadcast %cst_11 : f32 to vector<8x128xf32>
    %18 = arith.minimumf %17, %16 : vector<8x128xf32>
    %19 = arith.mulf %18, %18 : vector<8x128xf32>
    %cst_12 = arith.constant 8.000000e+00 : f32
    %20 = vector.broadcast %cst_12 : f32 to vector<8x128xf32>
    %21 = arith.mulf %20, %19 : vector<8x128xf32>
    %cst_13 = arith.constant 8.000000e+00 : f32
    %22 = vector.broadcast %cst_13 : f32 to vector<8x128xf32>
    %23 = arith.subf %21, %22 : vector<8x128xf32>
    %24 = arith.mulf %23, %19 : vector<8x128xf32>
    %cst_14 = arith.constant 1.000000e+00 : f32
    %25 = vector.broadcast %cst_14 : f32 to vector<8x128xf32>
    %26 = arith.addf %24, %25 : vector<8x128xf32>
    %cst_15 = arith.constant 0.000000e+00 : f32
    %27 = vector.broadcast %cst_15 : f32 to vector<8x128xf32>
    %cst_16 = arith.constant 0.707106769 : f32
    %28 = vector.broadcast %cst_16 : f32 to vector<8x128xf32>
    %29 = arith.cmpf ole, %18, %28 : vector<8x128xf32>
    %30 = arith.extui %29 : vector<8x128xi1> to vector<8x128xi32>
    %31 = arith.sitofp %30 : vector<8x128xi32> to vector<8x128xf32>
    %32 = arith.addf %27, %31 : vector<8x128xf32>
    %cst_17 = arith.constant 6.12323426E-17 : f32
    %33 = vector.broadcast %cst_17 : f32 to vector<8x128xf32>
    %34 = arith.cmpf ole, %18, %33 : vector<8x128xf32>
    %35 = arith.extui %34 : vector<8x128xi1> to vector<8x128xi32>
    %36 = arith.sitofp %35 : vector<8x128xi32> to vector<8x128xf32>
    %37 = arith.addf %32, %36 : vector<8x128xf32>
    %cst_18 = arith.constant -0.707106769 : f32
    %38 = vector.broadcast %cst_18 : f32 to vector<8x128xf32>
    %39 = arith.cmpf ole, %18, %38 : vector<8x128xf32>
    %40 = arith.extui %39 : vector<8x128xi1> to vector<8x128xi32>
    %41 = arith.sitofp %40 : vector<8x128xi32> to vector<8x128xf32>
    %42 = arith.addf %37, %41 : vector<8x128xf32>
    %cst_19 = arith.constant -1.000000e+00 : f32
    %43 = vector.broadcast %cst_19 : f32 to vector<8x128xf32>
    %44 = arith.cmpf ole, %18, %43 : vector<8x128xf32>
    %45 = arith.extui %44 : vector<8x128xi1> to vector<8x128xi32>
    %46 = arith.sitofp %45 : vector<8x128xi32> to vector<8x128xf32>
    %47 = arith.addf %42, %46 : vector<8x128xf32>
    %cst_20 = arith.constant 2.000000e+00 : f32
    %48 = vector.broadcast %cst_20 : f32 to vector<8x128xf32>
    %49 = arith.remf %47, %48 : vector<8x128xf32>
    %cst_21 = arith.constant 0.000000e+00 : f32
    %50 = vector.broadcast %cst_21 : f32 to vector<8x128xf32>
    %51 = arith.cmpf one, %49, %50 : vector<8x128xf32>
    %cst_22 = arith.constant 0.000000e+00 : f32
    %52 = vector.broadcast %cst_22 : f32 to vector<8x128xf32>
    %53 = arith.cmpf olt, %49, %52 : vector<8x128xf32>
    %cst_23 = arith.constant 0.000000e+00 : f32
    %54 = arith.cmpf olt, %cst_20, %cst_23 : f32
    %55 = vector.broadcast %54 : i1 to vector<8x128xi1>
    %56 = vector.broadcast %55 : vector<8x128xi1> to vector<8x128xi1>
    %57 = arith.xori %53, %56 : vector<8x128xi1>
    %58 = arith.andi %57, %51 : vector<8x128xi1>
    %59 = vector.broadcast %cst_20 : f32 to vector<8x128xf32>
    %60 = arith.addf %49, %59 : vector<8x128xf32>
    %61 = arith.select %58, %60, %49 : vector<8x128xi1>, vector<8x128xf32>
    %cst_24 = arith.constant 2.000000e+00 : f32
    %62 = vector.broadcast %cst_24 : f32 to vector<8x128xf32>
    %63 = arith.mulf %62, %61 : vector<8x128xf32>
    %cst_25 = arith.constant 1.000000e+00 : f32
    %64 = vector.broadcast %cst_25 : f32 to vector<8x128xf32>
    %65 = arith.subf %64, %63 : vector<8x128xf32>
    %66 = arith.mulf %65, %26 : vector<8x128xf32>
    %cst_26 = arith.constant 2.000000e+00 : f32
    %67 = vector.broadcast %cst_26 : f32 to vector<8x128xf32>
    %68 = arith.mulf %67, %47 : vector<8x128xf32>
    %69 = arith.subf %66, %68 : vector<8x128xf32>
    %70 = vector.broadcast %2 : vector<8x1xf32> to vector<8x128xf32>
    %71 = arith.mulf %18, %70 : vector<8x128xf32>
    %c0_27 = arith.constant 0 : index
    %c0_28 = arith.constant 0 : index
    %72 = vector.load %arg6[%c0_27, %c0_28] : memref<8x128xf32, #tpu.memory_space<vmem>>, vector<8x128xf32>
    tpu.vector_store %arg6[%c0_27, %c0_28], %71 {strides = array<i32>} : memref<8x128xf32, #tpu.memory_space<vmem>>, vector<8x128xf32>,
    %73 = vector.broadcast %2 : vector<8x1xf32> to vector<8x128xf32>
    %74 = arith.mulf %69, %73 : vector<8x128xf32>
    %c0_29 = arith.constant 0 : index
    %c0_30 = arith.constant 0 : index
    %75 = vector.load %arg7[%c0_29, %c0_30] : memref<8x128xf32, #tpu.memory_space<vmem>>, vector<8x128xf32>
    tpu.vector_store %arg7[%c0_29, %c0_30], %74 {strides = array<i32>} : memref<8x128xf32, #tpu.memory_space<vmem>>, vector<8x128xf32>,
    return
  }
  func.func @transform_0(%arg0: i32, %arg1: i32) -> (i32, i32) {
    %c0_i32 = arith.constant 0 : i32
    %c0_i32_0 = arith.constant 0 : i32
    return %arg1, %c0_i32 : i32, i32
  }
  func.func @transform_1(%arg0: i32, %arg1: i32) -> (i32, i32) {
    %c0_i32 = arith.constant 0 : i32
    %c0_i32_0 = arith.constant 0 : i32
    return %c0_i32, %arg0 : i32, i32
  }
  func.func @transform_2(%arg0: i32, %arg1: i32) -> (i32, i32) {
    %c0_i32 = arith.constant 0 : i32
    %c0_i32_0 = arith.constant 0 : i32
    return %arg1, %c0_i32 : i32, i32
  }
  func.func @transform_3(%arg0: i32, %arg1: i32) -> (i32, i32) {
    %c0_i32 = arith.constant 0 : i32
    %c0_i32_0 = arith.constant 0 : i32
    return %c0_i32, %arg0 : i32, i32
  }
  func.func @transform_4(%arg0: i32, %arg1: i32) -> (i32, i32) {
    %c0_i32 = arith.constant 0 : i32
    return %arg1, %arg0 : i32, i32
  }
  func.func @transform_5(%arg0: i32, %arg1: i32) -> (i32, i32) {
    %c0_i32 = arith.constant 0 : i32
    return %arg1, %arg0 : i32, i32
  }
}

</mosaic_0001>

<llo_original>
// kernel: tpu_custom_call.1
$region0: #{tpu_custom_call.1}
  #allocation0 [shape = 'u32[]', space=smem, size = 0x4, offset = 0x4, fixed_abs, tag = 'smem constant byte address 0x4 - core index']
  #allocation1 [shape = 'u32[144,128]{1,0:T(1,128)}', space=vmem, size = 0x12000, scoped, tag = 'internal scratch']
  %s0 = inlined_call_operand.vmem [shape: f32[8,32], index: 0, kind: input, shape index: {}]
  %s1 = inlined_call_operand.hbm [shape: f32[32,128], index: 1, kind: input, shape index: {}]
  %s2 = inlined_call_operand.vmem [shape: f32[8,1], index: 2, kind: input, shape index: {}]
  %s3 = inlined_call_operand.vmem [shape: f32[1,128], index: 3, kind: input, shape index: {}]
  %s4 = inlined_call_operand.hbm [shape: f32[8,128], index: 4, kind: output, shape index: {0}]
  %s5 = inlined_call_operand.hbm [shape: f32[8,128], index: 5, kind: output, shape index: {1}]
  %6 = xla_tuple %s4, %s5
  %s7 = sld [smem:[#allocation0]]
  $region38: #{tpu_custom_call.1} parent=0
    _
  %s9 = ssub.s32 1, %s7
  %s10 = scalar_select 0, %s9, %s7
  $region1: #{tpu_custom_call.1} parent=0
    #allocation2 [shape = 'u8[16384]{0}', space=vmem, size = 0x4000, scoped, tag = 'input window, operand 1, single buffered']
    #allocation3 [shape = 's32[1]{0}', space=sflag, size = 0x4, scoped, tag = 'scoped memory for tpu_custom_call.1']
    #allocation4 [shape = 's32[1]{0}', space=sflag, size = 0x4, scoped, tag = 'scoped memory for tpu_custom_call.1']
    #allocation5 [shape = 'u8[4096]{0}', space=vmem, size = 0x1000, scoped, tag = 'output window, operand 0, single buffered']
    #allocation6 [shape = 'u8[4096]{0}', space=vmem, size = 0x1000, scoped, tag = 'output window, operand 1, single buffered']
    #allocation7 [shape = 's32[1]{0}', space=sflag, size = 0x4, scoped, tag = 'scoped memory for tpu_custom_call.1']
    %11 = vsyncpa [#allocation3], 0
    %12 = vsyncpa [#allocation4], 0
    %13 = vsyncpa [#allocation7], 0
    // Predicated region
    $region2: #{tpu_custom_call.1} parent=1 // pred_check
      _
    $region3: #{tpu_custom_call.1} parent=1 // pred_check_branch
      %15 = sbr.rel (0) target = $region5
    $region4: #{tpu_custom_call.1} parent=1 // pred_region
      _
    $region5: #{tpu_custom_call.1} parent=1 // pred_fallthru
      _
    // Predicated region
    $region6: #{tpu_custom_call.1} parent=1 // pred_check
      _
    $region7: #{tpu_custom_call.1} parent=1 // pred_check_branch
      %17 = sbr.rel (0) target = $region9
    $region8: #{tpu_custom_call.1} parent=1 // pred_region
      %s19 = ssub.s32 512, 512
      %20 = vsyncadd [#allocation3], %s19
      %s21 = sshll.u32 [#allocation2], 4
      %s22 = int_to_ptr.vmem [resolvable:$true] %s21
      %27 = dma.hbm_to_vmem [thread:$0]  %s1, 512, %s22, [#allocation3], 128, 128, 8
    $region9: #{tpu_custom_call.1} parent=1 // pred_fallthru
      _
    // Predicated region
    $region10: #{tpu_custom_call.1} parent=1 // pred_check
      _
    $region11: #{tpu_custom_call.1} parent=1 // pred_check_branch
      %29 = sbr.rel (0) target = $region13
    $region12: #{tpu_custom_call.1} parent=1 // pred_region
      _
    $region13: #{tpu_custom_call.1} parent=1 // pred_fallthru
      _
    // Predicated region
    $region14: #{tpu_custom_call.1} parent=1 // pred_check
      _
    $region15: #{tpu_custom_call.1} parent=1 // pred_check_branch
      %31 = sbr.rel (0) target = $region17
    $region16: #{tpu_custom_call.1} parent=1 // pred_region
      _
    $region17: #{tpu_custom_call.1} parent=1 // pred_fallthru
      _
    // Predicated region
    $region18: #{tpu_custom_call.1} parent=1 // pred_check
      _
    $region19: #{tpu_custom_call.1} parent=1 // pred_check_branch
      %33 = sbr.rel (0) target = $region21
    $region20: #{tpu_custom_call.1} parent=1 // pred_region
      %34 = dma.done [#allocation3], 512
    $region21: #{tpu_custom_call.1} parent=1 // pred_fallthru
      _
    %v35 = vld [vmem:[%s0] sm:$0xff]
    %v36 = vld [vmem:[#allocation2] sm:$0xff]
    %v37 = vld [vmem:[#allocation2 + $0x8] sm:$0xff]
    %v38 = vld [vmem:[#allocation2 + $0x10] sm:$0xff]
    %v39 = vld [vmem:[#allocation2 + $0x18] sm:$0xff]
    %v40 = vld [vmem:[%s2] sm:$0xff]
    %v41 = vld [vmem:[%s3] sm:$0x1]
    %vm42 = vcmask 261120
    %v44 = vsel %vm42, %v35, 0
    %46 = vmatprep.subr.mxu0 0.0
    %47 = vmatpush1.msra.mxu0 %v36
    %48 = vmatprep.subr.mxu0 0.0
    %49 = vmatpush1.msra.mxu0 %v37
    %50 = vmatprep.subr.mxu0 0.0
    %51 = vmatpush1.msra.mxu0 %v38
    %52 = vmatprep.subr.mxu0 0.0
    %53 = vmatpush1.msra.mxu0 %v39
    %54 = vmatprep.subr.mxu0 0.0
    %55 = vmatpush1.msra.mxu0 0.0
    %56 = vmatprep.subr.mxu0 0.0
    %57 = vmatpush1.msra.mxu0 0.0
    %58 = vmatprep.subr.mxu0 0.0
    %59 = vmatpush1.msra.mxu0 0.0
    %60 = vmatprep.subr.mxu0 0.0
    %61 = vmatpush1.msra.mxu0 0.0
    %62 = vmatprep.subr.mxu0 0.0
    %63 = vmatpush1.msra.mxu0 0.0
    %64 = vmatprep.subr.mxu0 0.0
    %65 = vmatpush1.msra.mxu0 0.0
    %66 = vmatprep.subr.mxu0 0.0
    %67 = vmatpush1.msra.mxu0 0.0
    %68 = vmatprep.subr.mxu0 0.0
    %69 = vmatpush1.msra.mxu0 0.0
    %70 = vmatprep.subr.mxu0 0.0
    %71 = vmatpush1.msra.mxu0 0.0
    %72 = vmatprep.subr.mxu0 0.0
    %73 = vmatpush1.msra.mxu0 0.0
    %74 = vmatprep.subr.mxu0 0.0
    %75 = vmatpush1.msra.mxu0 0.0
    %76 = vmatprep.subr.mxu0 0.0
    %77 = vmatpush1.msra.mxu0 0.0
    %78 = vmatprep.subr.mxu0 0.0
    %79 = vmatpush1.msra.mxu0 0.0
    %80 = vmatprep.subr.mxu0 0.0
    %81 = vmatpush1.msra.mxu0 0.0
    %82 = vmatprep.subr.mxu0 0.0
    %83 = vmatpush1.msra.mxu0 0.0
    %84 = vmatprep.subr.mxu0 0.0
    %85 = vmatpush1.msra.mxu0 0.0
    %86 = vmatprep.subr.mxu0 0.0
    %87 = vmatpush1.msra.mxu0 0.0
    %88 = vmatprep.subr.mxu0 0.0
    %89 = vmatpush1.msra.mxu0 0.0
    %90 = vmatprep.subr.mxu0 0.0
    %91 = vmatpush1.msra.mxu0 0.0
    %92 = vmatprep.subr.mxu0 0.0
    %93 = vmatpush1.msra.mxu0 0.0
    %94 = vmatprep.subr.mxu0 0.0
    %95 = vmatpush1.msra.mxu0 0.0
    %96 = vmatprep.subr.mxu0 0.0
    %97 = vmatpush1.msra.mxu0 0.0
    %98 = vmatprep.subr.mxu0 0.0
    %99 = vmatpush1.msra.mxu0 0.0
    %100 = vmatprep.subr.mxu0 0.0
    %101 = vmatpush1.msra.mxu0 0.0
    %102 = vmatprep.subr.mxu0 0.0
    %103 = vmatpush1.msra.mxu0 0.0
    %104 = vmatprep.subr.mxu0 0.0
    %105 = vmatpush1.msra.mxu0 0.0
    %106 = vmatprep.subr.mxu0 0.0
    %107 = vmatpush1.msra.mxu0 0.0
    %108 = vmatprep.subr.mxu0 0.0
    %109 = vmatpush1.msra.mxu0 0.0
    %110 = vmatprep.mubr.f32.mxu0 0.0
    %111 = vmatmul.mubr.f32.gmra.mrb[0].mxu0 %v44
    %v112 = vpop.f32.mrb[0].mxu0
    %v113 = vadd.f32 0.0, %v112
    %v114 = vpop.f32.mrb[0].mxu0
    %115 = vdwg.mxu0
    %vm116 = vcmp.gt.f32.partialorder %v40, 0.0
    %v117 = vrcp.pop %v40
    %v118 = vmul.f32 1.0, %v117
    %v119 = vsel %vm116, %v118, 0.0
    %121 = vset.pattern.permute.xlu0 0
    %122 = vperm.xlu0 %121, %v119
    %v123 = vpop.permute.xlu0 %122
    %v125 = vmul.f32 %v113, %v123
    %v127 = vlaneseq
    %v128 = vshrl.u32 %v127, 7
    %v129 = vsub.s32 0, %v128
    %v130 = vrot.slane %v41, %v129
    %v132 = vmul.f32 %v125, %v130
    %v133 = vmax.f32 %v132, -1.0
    %v134 = vmin.f32 %v133, 1.0
    %v135 = vmul.f32 %v134, %v134
    %v136 = vmul.f32 %v135, 8.0
    %v137 = vsub.f32 %v136, 8.0
    %v138 = vmul.f32 %v137, %v135
    %v139 = vadd.f32 %v138, 1.0
    %vm140 = vcmp.le.f32.partialorder %v134, 0.70710677
    %v141 = vsel %vm140, 1, 0
    %v142 = vcvt.s32.f32 %v141
    %v143 = vadd.f32 %v142, 0.0
    %vm144 = vcmp.le.f32.partialorder %v134, 6.123234e-17
    %v145 = vsel %vm144, 1, 0
    %v146 = vcvt.s32.f32 %v145
    %v147 = vadd.f32 %v143, %v146
    %vm148 = vcmp.le.f32.partialorder %v134, -0.70710677
    %v149 = vsel %vm148, 1, 0
    %v150 = vcvt.s32.f32 %v149
    %v151 = vadd.f32 %v147, %v150
    %vm152 = vcmp.le.f32.partialorder %v134, -1.0
    %v153 = vsel %vm152, 1, 0
    %v154 = vcvt.s32.f32 %v153
    %v155 = vadd.f32 %v151, %v154
    %v156 = vand.u32 2147483647, %v155
    %v157 = vrcp.pop 2.0
    %v158 = vmul.f32 %v156, %v157
    %v159 = vfloor.f32 %v158
    %v160 = vmul.f32 %v159, 2.0
    %v161 = vsub.f32 %v156, %v160
    %vm162 = vcmp.eq.f32.partialorder %v161, 2.0
    %v163 = vsel %vm162, 0.0, %v161
    %v164 = vand.u32 2147483647, %v163
    %v165 = vand.u32 %v155, 2147483648
    %v166 = vor.u32 %v164, %v165
    %vm167 = vcmp.ne.f32.partialorder %v166, 0.0
    %vm168 = vcmp.lt.f32.partialorder %v166, 0.0
    %vm169 = vmand %vm168, %vm167
    %v170 = vadd.f32 %v166, 2.0
    %v171 = vsel %vm169, %v170, %v166
    %v172 = vmul.f32 %v171, 2.0
    %v173 = vsub.f32 1.0, %v172
    %v174 = vmul.f32 %v173, %v139
    %v175 = vmul.f32 %v155, 2.0
    %v176 = vsub.f32 %v174, %v175
    %178 = vset.pattern.permute.xlu0 0
    %179 = vperm.xlu0 %178, %v40
    %v180 = vpop.permute.xlu0 %179
    %v182 = vmul.f32 %v134, %v180
    %183 = vst [vmem:[#allocation5] sm:$0xff] %v182
    %v184 = vmul.f32 %v176, %v180
    %185 = vst [vmem:[#allocation6] sm:$0xff] %v184
    // Predicated region
    $region22: #{tpu_custom_call.1} parent=1 // pred_check
      _
    $region23: #{tpu_custom_call.1} parent=1 // pred_check_branch
      %187 = sbr.rel (0) target = $region25
    $region24: #{tpu_custom_call.1} parent=1 // pred_region
      %s189 = ssub.s32 128, 128
      %190 = vsyncadd [#allocation4], %s189
      %s192 = sshll.u32 [#allocation5], 4
      %s193 = int_to_ptr.vmem [resolvable:$true] %s192
      %195 = dma.vmem_to_hbm [thread:$0]  %s193, 128, %s4, [#allocation4]
    $region25: #{tpu_custom_call.1} parent=1 // pred_fallthru
      _
    // Predicated region
    $region26: #{tpu_custom_call.1} parent=1 // pred_check
      _
    $region27: #{tpu_custom_call.1} parent=1 // pred_check_branch
      %197 = sbr.rel (0) target = $region29
    $region28: #{tpu_custom_call.1} parent=1 // pred_region
      %s199 = ssub.s32 128, 128
      %200 = vsyncadd [#allocation7], %s199
      %s202 = sshll.u32 [#allocation6], 4
      %s203 = int_to_ptr.vmem [resolvable:$true] %s202
      %205 = dma.vmem_to_hbm [thread:$0]  %s203, 128, %s5, [#allocation7]
    $region29: #{tpu_custom_call.1} parent=1 // pred_fallthru
      _
    // Predicated region
    $region30: #{tpu_custom_call.1} parent=1 // pred_check
      _
    $region31: #{tpu_custom_call.1} parent=1 // pred_check_branch
      %207 = sbr.rel (0) target = $region33
    $region32: #{tpu_custom_call.1} parent=1 // pred_region
      %208 = dma.done [#allocation4], 128
    $region33: #{tpu_custom_call.1} parent=1 // pred_fallthru
      _
    // Predicated region
    $region34: #{tpu_custom_call.1} parent=1 // pred_check
      _
    $region35: #{tpu_custom_call.1} parent=1 // pred_check_branch
      %210 = sbr.rel (0) target = $region37
    $region36: #{tpu_custom_call.1} parent=1 // pred_region
      %211 = dma.done [#allocation7], 128
    $region37: #{tpu_custom_call.1} parent=1 // pred_fallthru
      _
    %212 = vsyncpa [#allocation3], 1
    %213 = vsyncpa [#allocation4], 1
    %214 = vsyncpa [#allocation7], 1

</llo_original>
